<compile_context>
chip_gen: v7x
topology: tpu7x:2x2x1
jax: 0.10.0
libtpu: 0.0.40
codegen_flags: <defaults>
</compile_context>

<pallas_src>
import functools

import jax
import jax.numpy as jnp
from jax.experimental import pallas as pl
from jax.experimental.pallas import tpu as pltpu

BN_EPS = 1e-5


def _round_up(x, m):
    return (x + m - 1) // m * m


def _pad2(a, shape):
    return jnp.pad(a, [(0, t - s) for s, t in zip(a.shape, shape)])


# --------------------------------------------------------------------------------------
# Path 1: single fused grid step (small / medium batch -- the shipped problem size).
# --------------------------------------------------------------------------------------
def receiver_fused_kernel(x_ref, wv_ref, bv_ref, w1_ref, b1_ref, gamma_ref, beta_ref,
                          w2_ref, fc_out_ref, vis_out_ref):
    # Vision stand-in: GAP folded into the projection (wv_ref = repeat(wv/HW, HW, axis=0)),
    # so this single MXU contraction IS mean-pool + Linear.
    vis = jnp.dot(x_ref[...], wv_ref[...],
                  preferred_element_type=jnp.float32) + bv_ref[...]        # (B, Dp) f32
    vis_out_ref[...] = vis                                                 # single store

    # Head: Linear -> BatchNorm1d (train-mode batch stats, fused affine) -> ReLU -> Linear.
    h = jnp.dot(vis.astype(w1_ref.dtype), w1_ref[...],
                preferred_element_type=jnp.float32) + b1_ref[...]          # (B, Hp) f32
    mu = jnp.mean(h, axis=0, keepdims=True)
    var = jnp.mean((h - mu) * (h - mu), axis=0, keepdims=True)
    s = gamma_ref[...] * jax.lax.rsqrt(var + BN_EPS)
    t = beta_ref[...] - mu * s
    h = jnp.maximum(h * s + t, 0.0)                                        # BN + ReLU (f32)
    fc_out_ref[...] = jnp.dot(h.astype(w2_ref.dtype), w2_ref[...],
                              preferred_element_type=jnp.float32)          # Linear, no bias


# --------------------------------------------------------------------------------------
# Path 2: streamed over batch tiles (large B).  w1 matmul + BN partial sums are done
# per-tile inside the pipelined body; the last step only normalizes and runs w2.
# --------------------------------------------------------------------------------------
def receiver_stream_kernel(x_ref, wv_ref, bv_ref, w1_ref, b1_ref, gamma_ref, beta_ref,
                           w2_ref, fc_out_ref, vis_out_ref,
                           h_acc_ref, sum_ref, sumsq_ref):
    i = pl.program_id(0)
    tile_b = x_ref.shape[0]

    @pl.when(i == 0)
    def _():
        sum_ref[...] = jnp.zeros_like(sum_ref)
        sumsq_ref[...] = jnp.zeros_like(sumsq_ref)

    # Vision stand-in (GAP folded into the projection weight).
    vis = jnp.dot(x_ref[...], wv_ref[...],
                  preferred_element_type=jnp.float32) + bv_ref[...]        # (tile_b, Dp) f32
    vis_out_ref[...] = vis                              # streamed, lane-dense, single store

    # First head Linear, hoisted into the pipelined body (overlaps with x DMA).
    h = jnp.dot(vis.astype(w1_ref.dtype), w1_ref[...],
                preferred_element_type=jnp.float32) + b1_ref[...]          # (tile_b, Hp) f32
    row0 = pl.multiple_of(i * tile_b, tile_b)
    h_acc_ref[pl.ds(row0, tile_b), :] = h.astype(h_acc_ref.dtype)          # bf16 resident
    sum_ref[...] += jnp.sum(h, axis=0, keepdims=True)                      # BN partial sums
    sumsq_ref[...] += jnp.sum(h * h, axis=0, keepdims=True)

    # BatchNorm1d statistics span the whole batch -> tiny serialized tail on the last step.
    @pl.when(i == pl.num_programs(0) - 1)
    def _():
        bsz = h_acc_ref.shape[0]
        inv_b = 1.0 / bsz
        mu = sum_ref[...] * inv_b
        var = jnp.maximum(sumsq_ref[...] * inv_b - mu * mu, 0.0)
        s = gamma_ref[...] * jax.lax.rsqrt(var + BN_EPS)
        t = beta_ref[...] - mu * s
        hh = jnp.maximum(h_acc_ref[...].astype(jnp.float32) * s + t, 0.0)  # BN + ReLU (f32)
        fc_out_ref[...] = jnp.dot(hh.astype(w2_ref.dtype), w2_ref[...],
                                  preferred_element_type=jnp.float32)      # Linear, no bias


@functools.partial(jax.jit, static_argnames=("tile_b", "single_step_max_b"))
def receiver_forward(x_nchw, params, *, tile_b=128, single_step_max_b=512):
    """Returns (fc(vision_output), vision_output) — same as the PyTorch module."""
    B, C, H, W = x_nchw.shape
    HW = H * W
    chw = C * HW
    wv, bv, w1, b1, gamma, beta, w2 = params
    input_dim, hidden_dim, output_dim = wv.shape[1], w1.shape[1], w2.shape[1]

    # Lane-dense padded feature dims (zero padding is exact; sliced off below).
    Dp = _round_up(input_dim, 128)
    Hp = _round_up(hidden_dim, 128)
    Op = _round_up(output_dim, 128)

    # bf16 activations/weights halve HBM traffic; MXU accumulates in f32 in-kernel.
    x2 = x_nchw.reshape(B, chw).astype(jnp.bfloat16)
    # Fold the 1/(H*W) global-average-pool into the projection weight.
    wv_exp = _pad2(jnp.repeat(wv / HW, HW, axis=0), (chw, Dp)).astype(jnp.bfloat16)
    bv_p = _pad2(bv, (1, Dp)).astype(jnp.float32)
    w1_p = _pad2(w1, (Dp, Hp)).astype(jnp.bfloat16)
    b1_p = _pad2(b1, (1, Hp)).astype(jnp.float32)
    gamma_p = _pad2(gamma, (1, Hp)).astype(jnp.float32)
    beta_p = _pad2(beta, (1, Hp)).astype(jnp.float32)
    w2_p = _pad2(w2, (Hp, Op)).astype(jnp.bfloat16)

    weight_bytes = (chw * Dp + Dp * Hp + Hp * Op) * 2 + (4 * Hp + Dp) * 4
    out_shape = (jax.ShapeDtypeStruct((B, Op), jnp.float32),   # fc(vision_output), padded
                 jax.ShapeDtypeStruct((B, Dp), jnp.float32))   # vision_output, padded

    single_step = (B <= single_step_max_b) or (B % tile_b != 0)

    if single_step:
        # One grid step: no scratch, no pl.when tail, no duplicate stores.
        resident = (B * chw * 2 + B * Dp * 4 + B * Op * 4 + 2 * B * Hp * 4 + weight_bytes)
        vmem_limit = min(max(2 * resident + (4 << 20), 32 << 20), 64 << 20)
        fc_pad, vis_pad = pl.pallas_call(
            receiver_fused_kernel,
            out_shape=out_shape,
            grid_spec=pltpu.PrefetchScalarGridSpec(
                num_scalar_prefetch=0,
                grid=(1,),
                in_specs=[
                    pl.BlockSpec((B, chw), lambda i: (0, 0)),     # x (flattened, bf16)
                    pl.BlockSpec((chw, Dp), lambda i: (0, 0)),    # wv (GAP folded in)
                    pl.BlockSpec((1, Dp), lambda i: (0, 0)),      # bv
                    pl.BlockSpec((Dp, Hp), lambda i: (0, 0)),     # w1
                    pl.BlockSpec((1, Hp), lambda i: (0, 0)),      # b1
                    pl.BlockSpec((1, Hp), lambda i: (0, 0)),      # gamma
                    pl.BlockSpec((1, Hp), lambda i: (0, 0)),      # beta
                    pl.BlockSpec((Hp, Op), lambda i: (0, 0)),     # w2
                ],
                out_specs=[
                    pl.BlockSpec((B, Op), lambda i: (0, 0)),
                    pl.BlockSpec((B, Dp), lambda i: (0, 0)),
                ],
            ),
            compiler_params=pltpu.CompilerParams(
                dimension_semantics=("arbitrary",),
                vmem_limit_bytes=vmem_limit,
            ),
        )(x2, wv_exp, bv_p, w1_p, b1_p, gamma_p, beta_p, w2_p)
    else:
        # Streamed batch tiles; BN couples the whole batch -> the grid axis is "arbitrary".
        resident = (2 * tile_b * chw * 2      # double-buffered x tiles
                    + 2 * tile_b * Dp * 4     # double-buffered streamed vis tiles
                    + B * Op * 4              # resident fc output block
                    + B * Hp * 2              # bf16 hidden-activation accumulator
                    + 2 * Hp * 4              # BN running sums
                    + weight_bytes)
        vmem_limit = min(max(2 * resident + (4 << 20), 32 << 20), 64 << 20)
        fc_pad, vis_pad = pl.pallas_call(
            receiver_stream_kernel,
            out_shape=out_shape,
            grid_spec=pltpu.PrefetchScalarGridSpec(
                num_scalar_prefetch=0,
                grid=(B // tile_b,),
                in_specs=[
                    pl.BlockSpec((tile_b, chw), lambda i: (i, 0)),   # x: streamed over batch
                    pl.BlockSpec((chw, Dp), lambda i: (0, 0)),       # wv (GAP folded in)
                    pl.BlockSpec((1, Dp), lambda i: (0, 0)),         # bv
                    pl.BlockSpec((Dp, Hp), lambda i: (0, 0)),        # w1
                    pl.BlockSpec((1, Hp), lambda i: (0, 0)),         # b1
                    pl.BlockSpec((1, Hp), lambda i: (0, 0)),         # gamma
                    pl.BlockSpec((1, Hp), lambda i: (0, 0)),         # beta
                    pl.BlockSpec((Hp, Op), lambda i: (0, 0)),        # w2
                ],
                out_specs=[
                    pl.BlockSpec((B, Op), lambda i: (0, 0)),         # fc: written last step
                    pl.BlockSpec((tile_b, Dp), lambda i: (i, 0)),    # vis: streamed per tile
                ],
                scratch_shapes=[
                    pltpu.VMEM((B, Hp), jnp.bfloat16),   # resident hidden activations (bf16)
                    pltpu.VMEM((1, Hp), jnp.float32),    # sum(h)
                    pltpu.VMEM((1, Hp), jnp.float32),    # sum(h*h)
                ],
            ),
            compiler_params=pltpu.CompilerParams(
                dimension_semantics=("arbitrary",),
                vmem_limit_bytes=vmem_limit,
            ),
        )(x2, wv_exp, bv_p, w1_p, b1_p, gamma_p, beta_p, w2_p)

    return fc_pad[:, :output_dim], vis_pad[:, :input_dim]


def init_params(key, C, input_dim, hidden_dim, output_dim):
    k0, k1, k2, k3, k4 = jax.random.split(key, 5)

    def lin(k, fan_in, fan_out):
        lim = 1.0 / jnp.sqrt(jnp.float32(fan_in))
        return jax.random.uniform(k, (fan_in, fan_out), jnp.float32, -lim, lim)

    wv = lin(k0, C, input_dim)
    bv = jax.random.uniform(k1, (1, input_dim), jnp.float32,
                            -1.0 / jnp.sqrt(jnp.float32(C)), 1.0 / jnp.sqrt(jnp.float32(C)))
    w1 = lin(k2, input_dim, hidden_dim)
    b1 = jax.random.uniform(k3, (1, hidden_dim), jnp.float32,
                            -1.0 / jnp.sqrt(jnp.float32(input_dim)),
                            1.0 / jnp.sqrt(jnp.float32(input_dim)))
    gamma = jnp.ones((1, hidden_dim), jnp.float32)   # BatchNorm1d default affine init
    beta = jnp.zeros((1, hidden_dim), jnp.float32)
    w2 = lin(k4, hidden_dim, output_dim)
    return (wv, bv, w1, b1, gamma, beta, w2)


def reference_forward(x_nchw, params, *, h_resident_dtype=jnp.float32):
    """Pure-JAX reference mirroring the kernel's bf16-operand / f32-accumulate data path."""
    wv, bv, w1, b1, gamma, beta, w2 = params
    B, C, H, W = x_nchw.shape
    HW = H * W

    def bf(a):  # round-trip through bf16 like the kernel operands
        return a.astype(jnp.bfloat16).astype(jnp.float32)

    x2 = bf(x_nchw.reshape(B, C * HW))
    wv_exp = bf(jnp.repeat(wv / HW, HW, axis=0))
    vis = x2 @ wv_exp + bv                                   # GAP folded into projection
    h = bf(vis) @ bf(w1) + b1
    mu = jnp.mean(h, axis=0, keepdims=True)
    var = jnp.mean((h - mu) ** 2, axis=0, keepdims=True)
    # streaming kernel keeps the resident hidden activations in bf16 (stats stay f32)
    h_res = h.astype(h_resident_dtype).astype(jnp.float32)
    hn = jnp.maximum((h_res - mu) * jax.lax.rsqrt(var + BN_EPS) * gamma + beta, 0.0)
    fc = bf(hn) @ bf(w2)
    return fc, vis


if __name__ == "__main__":
    C, H, W = 4, 16, 16
    input_dim, hidden_dim, output_dim = 32, 64, 32

    key = jax.random.PRNGKey(0)
    k_x, k_p, k_xl = jax.random.split(key, 3)
    params = init_params(k_p, C, input_dim, hidden_dim, output_dim)

    # --- shipped problem size: single fused grid step ---
    B = 16
    x = jax.random.normal(k_x, (B, C, H, W), jnp.float32)
    fc_out, vis_out = receiver_forward(x, params)
    jax.block_until_ready((fc_out, vis_out))
    fc_ref, vis_ref = reference_forward(x, params)
    assert fc_out.shape == (B, output_dim) and vis_out.shape == (B, input_dim)
    assert jnp.allclose(vis_out, vis_ref, atol=1e-2, rtol=1e-2), \
        float(jnp.max(jnp.abs(vis_out - vis_ref)))
    assert jnp.allclose(fc_out, fc_ref, atol=1e-2, rtol=1e-2), \
        float(jnp.max(jnp.abs(fc_out - fc_ref)))

    # --- large batch: streamed/pipelined path (tile_b=128, in-body w1 + BN partial sums) ---
    Bl = 256
    xl = jax.random.normal(k_xl, (Bl, C, H, W), jnp.float32)
    fc_l, vis_l = receiver_forward(xl, params, tile_b=128, single_step_max_b=128)
    jax.block_until_ready((fc_l, vis_l))
    fc_lr, vis_lr = reference_forward(xl, params, h_resident_dtype=jnp.bfloat16)
    assert fc_l.shape == (Bl, output_dim) and vis_l.shape == (Bl, input_dim)
    assert jnp.allclose(vis_l, vis_lr, atol=1e-2, rtol=1e-2), \
        float(jnp.max(jnp.abs(vis_l - vis_lr)))
    assert jnp.allclose(fc_l, fc_lr, atol=2e-2, rtol=2e-2), \
        float(jnp.max(jnp.abs(fc_l - fc_lr)))

    print("KERNEL_OK")
</pallas_src>

<mosaic_0001>
module attributes {stable_mosaic.version = 11 : i64} {
  func.func @receiver_fused_kernel(%arg0: i32, %arg1: memref<16x1024xbf16, #tpu.memory_space<vmem>>, %arg2: memref<1024x128xbf16, #tpu.memory_space<vmem>>, %arg3: memref<1x128xf32, #tpu.memory_space<vmem>>, %arg4: memref<128x128xbf16, #tpu.memory_space<vmem>>, %arg5: memref<1x128xf32, #tpu.memory_space<vmem>>, %arg6: memref<1x128xf32, #tpu.memory_space<vmem>>, %arg7: memref<1x128xf32, #tpu.memory_space<vmem>>, %arg8: memref<128x128xbf16, #tpu.memory_space<vmem>>, %arg9: memref<16x128xf32, #tpu.memory_space<vmem>>, %arg10: memref<16x128xf32, #tpu.memory_space<vmem>>) attributes {dimension_semantics = [#tpu.dimension_semantics<arbitrary>], iteration_bounds = array<i64: 1>, scalar_prefetch = 0 : i64, scratch_operands = 0 : i64, tpu.core_type = #tpu.core_type<tc>, window_params = [{pipeline_mode = #tpu.pipeline_mode<synchronous>, transform_indices = @transform_0, window_bounds = array<i64: 16, 1024>}, {pipeline_mode = #tpu.pipeline_mode<synchronous>, transform_indices = @transform_1, window_bounds = array<i64: 1024, 128>}, {pipeline_mode = #tpu.pipeline_mode<synchronous>, transform_indices = @transform_2, window_bounds = array<i64: 1, 128>}, {pipeline_mode = #tpu.pipeline_mode<synchronous>, transform_indices = @transform_3, window_bounds = array<i64: 128, 128>}, {pipeline_mode = #tpu.pipeline_mode<synchronous>, transform_indices = @transform_4, window_bounds = array<i64: 1, 128>}, {pipeline_mode = #tpu.pipeline_mode<synchronous>, transform_indices = @transform_5, window_bounds = array<i64: 1, 128>}, {pipeline_mode = #tpu.pipeline_mode<synchronous>, transform_indices = @transform_6, window_bounds = array<i64: 1, 128>}, {pipeline_mode = #tpu.pipeline_mode<synchronous>, transform_indices = @transform_7, window_bounds = array<i64: 128, 128>}, {pipeline_mode = #tpu.pipeline_mode<synchronous>, transform_indices = @transform_8, window_bounds = array<i64: 16, 128>}, {pipeline_mode = #tpu.pipeline_mode<synchronous>, transform_indices = @transform_9, window_bounds = array<i64: 16, 128>}]} {
    %c0 = arith.constant 0 : index
    %c0_0 = arith.constant 0 : index
    %0 = vector.load %arg1[%c0, %c0_0] : memref<16x1024xbf16, #tpu.memory_space<vmem>>, vector<16x1024xbf16>
    %c0_1 = arith.constant 0 : index
    %c0_2 = arith.constant 0 : index
    %1 = vector.load %arg2[%c0_1, %c0_2] : memref<1024x128xbf16, #tpu.memory_space<vmem>>, vector<1024x128xbf16>
    %cst = arith.constant dense<0.000000e+00> : vector<16x128xf32>
    %2 = tpu.matmul %0, %1, %cst {dimension_numbers = #tpu.dot_dimension_numbers<[1], [0], [0], [1], [0, 0, 1, 1], [], []>} : vector<16x1024xbf16>, vector<1024x128xbf16>, vector<16x128xf32> -> vector<16x128xf32>
    %c0_3 = arith.constant 0 : index
    %c0_4 = arith.constant 0 : index
    %3 = vector.load %arg3[%c0_3, %c0_4] : memref<1x128xf32, #tpu.memory_space<vmem>>, vector<1x128xf32>
    %4 = vector.broadcast %3 : vector<1x128xf32> to vector<16x128xf32>
    %5 = arith.addf %2, %4 : vector<16x128xf32>
    %c0_5 = arith.constant 0 : index
    %c0_6 = arith.constant 0 : index
    %6 = vector.load %arg10[%c0_5, %c0_6] : memref<16x128xf32, #tpu.memory_space<vmem>>, vector<16x128xf32>
    tpu.vector_store %arg10[%c0_5, %c0_6], %5 {strides = array<i32>} : memref<16x128xf32, #tpu.memory_space<vmem>>, vector<16x128xf32>,
    %7 = arith.truncf %5 : vector<16x128xf32> to vector<16x128xbf16>
    %c0_7 = arith.constant 0 : index
    %c0_8 = arith.constant 0 : index
    %8 = vector.load %arg4[%c0_7, %c0_8] : memref<128x128xbf16, #tpu.memory_space<vmem>>, vector<128x128xbf16>
    %cst_9 = arith.constant dense<0.000000e+00> : vector<16x128xf32>
    %9 = tpu.matmul %7, %8, %cst_9 {dimension_numbers = #tpu.dot_dimension_numbers<[1], [0], [0], [1], [0, 0, 1, 1], [], []>} : vector<16x128xbf16>, vector<128x128xbf16>, vector<16x128xf32> -> vector<16x128xf32>
    %c0_10 = arith.constant 0 : index
    %c0_11 = arith.constant 0 : index
    %10 = vector.load %arg5[%c0_10, %c0_11] : memref<1x128xf32, #tpu.memory_space<vmem>>, vector<1x128xf32>
    %11 = vector.broadcast %10 : vector<1x128xf32> to vector<16x128xf32>
    %12 = arith.addf %9, %11 : vector<16x128xf32>
    %cst_12 = arith.constant dense<0.000000e+00> : vector<128xf32>
    %13 = vector.multi_reduction <add>, %12, %cst_12 [0] : vector<16x128xf32> to vector<128xf32>
    %14 = vector.shape_cast %13 : vector<128xf32> to vector<1x128xf32>
    %cst_13 = arith.constant 1.600000e+01 : f32
    %15 = vector.broadcast %cst_13 : f32 to vector<1x128xf32>
    %16 = arith.divf %14, %15 : vector<1x128xf32>
    %17 = vector.broadcast %16 : vector<1x128xf32> to vector<16x128xf32>
    %18 = arith.subf %12, %17 : vector<16x128xf32>
    %19 = vector.broadcast %16 : vector<1x128xf32> to vector<16x128xf32>
    %20 = arith.subf %12, %19 : vector<16x128xf32>
    %21 = arith.mulf %18, %20 : vector<16x128xf32>
    %cst_14 = arith.constant dense<0.000000e+00> : vector<128xf32>
    %22 = vector.multi_reduction <add>, %21, %cst_14 [0] : vector<16x128xf32> to vector<128xf32>
    %23 = vector.shape_cast %22 : vector<128xf32> to vector<1x128xf32>
    %cst_15 = arith.constant 1.600000e+01 : f32
    %24 = vector.broadcast %cst_15 : f32 to vector<1x128xf32>
    %25 = arith.divf %23, %24 : vector<1x128xf32>
    %c0_16 = arith.constant 0 : index
    %c0_17 = arith.constant 0 : index
    %26 = vector.load %arg6[%c0_16, %c0_17] : memref<1x128xf32, #tpu.memory_space<vmem>>, vector<1x128xf32>
    %cst_18 = arith.constant 9.99999974E-6 : f32
    %27 = vector.broadcast %cst_18 : f32 to vector<1x128xf32>
    %28 = arith.addf %25, %27 : vector<1x128xf32>
    %29 = math.rsqrt %28 : vector<1x128xf32>
    %30 = arith.mulf %26, %29 : vector<1x128xf32>
    %c0_19 = arith.constant 0 : index
    %c0_20 = arith.constant 0 : index
    %31 = vector.load %arg7[%c0_19, %c0_20] : memref<1x128xf32, #tpu.memory_space<vmem>>, vector<1x128xf32>
    %32 = arith.mulf %16, %30 : vector<1x128xf32>
    %33 = arith.subf %31, %32 : vector<1x128xf32>
    %34 = vector.broadcast %30 : vector<1x128xf32> to vector<16x128xf32>
    %35 = arith.mulf %12, %34 : vector<16x128xf32>
    %36 = vector.broadcast %33 : vector<1x128xf32> to vector<16x128xf32>
    %37 = arith.addf %35, %36 : vector<16x128xf32>
    %cst_21 = arith.constant 0.000000e+00 : f32
    %38 = vector.broadcast %cst_21 : f32 to vector<16x128xf32>
    %39 = arith.maximumf %37, %38 : vector<16x128xf32>
    %40 = arith.truncf %39 : vector<16x128xf32> to vector<16x128xbf16>
    %c0_22 = arith.constant 0 : index
    %c0_23 = arith.constant 0 : index
    %41 = vector.load %arg8[%c0_22, %c0_23] : memref<128x128xbf16, #tpu.memory_space<vmem>>, vector<128x128xbf16>
    %cst_24 = arith.constant dense<0.000000e+00> : vector<16x128xf32>
    %42 = tpu.matmul %40, %41, %cst_24 {dimension_numbers = #tpu.dot_dimension_numbers<[1], [0], [0], [1], [0, 0, 1, 1], [], []>} : vector<16x128xbf16>, vector<128x128xbf16>, vector<16x128xf32> -> vector<16x128xf32>
    %c0_25 = arith.constant 0 : index
    %c0_26 = arith.constant 0 : index
    %43 = vector.load %arg9[%c0_25, %c0_26] : memref<16x128xf32, #tpu.memory_space<vmem>>, vector<16x128xf32>
    tpu.vector_store %arg9[%c0_25, %c0_26], %42 {strides = array<i32>} : memref<16x128xf32, #tpu.memory_space<vmem>>, vector<16x128xf32>,
    return
  }
  func.func @transform_0(%arg0: i32) -> (i32, i32) {
    %c0_i32 = arith.constant 0 : i32
    %c0_i32_0 = arith.constant 0 : i32
    %c0_i32_1 = arith.constant 0 : i32
    return %c0_i32, %c0_i32_0 : i32, i32
  }
  func.func @transform_1(%arg0: i32) -> (i32, i32) {
    %c0_i32 = arith.constant 0 : i32
    %c0_i32_0 = arith.constant 0 : i32
    %c0_i32_1 = arith.constant 0 : i32
    return %c0_i32, %c0_i32_0 : i32, i32
  }
  func.func @transform_2(%arg0: i32) -> (i32, i32) {
    %c0_i32 = arith.constant 0 : i32
    %c0_i32_0 = arith.constant 0 : i32
    %c0_i32_1 = arith.constant 0 : i32
    return %c0_i32, %c0_i32_0 : i32, i32
  }
  func.func @transform_3(%arg0: i32) -> (i32, i32) {
    %c0_i32 = arith.constant 0 : i32
    %c0_i32_0 = arith.constant 0 : i32
    %c0_i32_1 = arith.constant 0 : i32
    return %c0_i32, %c0_i32_0 : i32, i32
  }
  func.func @transform_4(%arg0: i32) -> (i32, i32) {
    %c0_i32 = arith.constant 0 : i32
    %c0_i32_0 = arith.constant 0 : i32
    %c0_i32_1 = arith.constant 0 : i32
    return %c0_i32, %c0_i32_0 : i32, i32
  }
  func.func @transform_5(%arg0: i32) -> (i32, i32) {
    %c0_i32 = arith.constant 0 : i32
    %c0_i32_0 = arith.constant 0 : i32
    %c0_i32_1 = arith.constant 0 : i32
    return %c0_i32, %c0_i32_0 : i32, i32
  }
  func.func @transform_6(%arg0: i32) -> (i32, i32) {
    %c0_i32 = arith.constant 0 : i32
    %c0_i32_0 = arith.constant 0 : i32
    %c0_i32_1 = arith.constant 0 : i32
    return %c0_i32, %c0_i32_0 : i32, i32
  }
  func.func @transform_7(%arg0: i32) -> (i32, i32) {
    %c0_i32 = arith.constant 0 : i32
    %c0_i32_0 = arith.constant 0 : i32
    %c0_i32_1 = arith.constant 0 : i32
    return %c0_i32, %c0_i32_0 : i32, i32
  }
  func.func @transform_8(%arg0: i32) -> (i32, i32) {
    %c0_i32 = arith.constant 0 : i32
    %c0_i32_0 = arith.constant 0 : i32
    %c0_i32_1 = arith.constant 0 : i32
    return %c0_i32, %c0_i32_0 : i32, i32
  }
  func.func @transform_9(%arg0: i32) -> (i32, i32) {
    %c0_i32 = arith.constant 0 : i32
    %c0_i32_0 = arith.constant 0 : i32
    %c0_i32_1 = arith.constant 0 : i32
    return %c0_i32, %c0_i32_0 : i32, i32
  }
}

</mosaic_0001>

<llo_original>
// kernel: receiver_forward.1
$region0: #{receiver_forward.1}
  #allocation0 [shape = 'u32[]', space=smem, size = 0x4, offset = 0x4, fixed_abs, tag = 'smem constant byte address 0x4 - core index']
  #allocation1 [shape = 'u32[144,128]{1,0:T(1,128)}', space=vmem, size = 0x12000, scoped, tag = 'internal scratch']
  %s0 = inlined_call_operand.vmem [shape: bf16[16,1024], index: 0, kind: input, shape index: {}]
  %s1 = inlined_call_operand.vmem [shape: bf16[1024,128], index: 1, kind: input, shape index: {}]
  %s2 = inlined_call_operand.vmem [shape: f32[1,128], index: 2, kind: input, shape index: {}]
  %s3 = inlined_call_operand.vmem [shape: bf16[128,128], index: 3, kind: input, shape index: {}]
  %s4 = inlined_call_operand.vmem [shape: f32[1,128], index: 4, kind: input, shape index: {}]
  %s5 = inlined_call_operand.vmem [shape: f32[1,128], index: 5, kind: input, shape index: {}]
  %s6 = inlined_call_operand.vmem [shape: f32[1,128], index: 6, kind: input, shape index: {}]
  %s7 = inlined_call_operand.vmem [shape: bf16[128,128], index: 7, kind: input, shape index: {}]
  %s8 = inlined_call_operand.hbm [shape: f32[16,128], index: 8, kind: output, shape index: {0}]
  %s9 = inlined_call_operand.hbm [shape: f32[16,128], index: 9, kind: output, shape index: {1}]
  %10 = xla_tuple %s8, %s9
  %s11 = sld [smem:[#allocation0]]
  $region50: #{receiver_forward.1} parent=0
    _
  %s13 = ssub.s32 1, %s11
  %s14 = scalar_select 0, %s13, %s11
  $region1: #{receiver_forward.1} parent=0
    #allocation2 [shape = 'u8[8192]{0}', space=vmem, size = 0x2000, scoped, tag = 'output window, operand 0, single buffered']
    #allocation3 [shape = 's32[1]{0}', space=sflag, size = 0x4, scoped, tag = 'scoped memory for receiver_forward.1']
    #allocation4 [shape = 'u8[8192]{0}', space=vmem, size = 0x2000, scoped, tag = 'output window, operand 1, single buffered']
    #allocation5 [shape = 's32[1]{0}', space=sflag, size = 0x4, scoped, tag = 'scoped memory for receiver_forward.1']
    %15 = vsyncpa [#allocation3], 0
    %16 = vsyncpa [#allocation5], 0
    // Predicated region
    $region2: #{receiver_forward.1} parent=1 // pred_check
      _
    $region3: #{receiver_forward.1} parent=1 // pred_check_branch
      %18 = sbr.rel (0) target = $region5
    $region4: #{receiver_forward.1} parent=1 // pred_region
      _
    $region5: #{receiver_forward.1} parent=1 // pred_fallthru
      _
    // Predicated region
    $region6: #{receiver_forward.1} parent=1 // pred_check
      _
    $region7: #{receiver_forward.1} parent=1 // pred_check_branch
      %20 = sbr.rel (0) target = $region9
    $region8: #{receiver_forward.1} parent=1 // pred_region
      _
    $region9: #{receiver_forward.1} parent=1 // pred_fallthru
      _
    // Predicated region
    $region10: #{receiver_forward.1} parent=1 // pred_check
      _
    $region11: #{receiver_forward.1} parent=1 // pred_check_branch
      %22 = sbr.rel (0) target = $region13
    $region12: #{receiver_forward.1} parent=1 // pred_region
      _
    $region13: #{receiver_forward.1} parent=1 // pred_fallthru
      _
    // Predicated region
    $region14: #{receiver_forward.1} parent=1 // pred_check
      _
    $region15: #{receiver_forward.1} parent=1 // pred_check_branch
      %24 = sbr.rel (0) target = $region17
    $region16: #{receiver_forward.1} parent=1 // pred_region
      _
    $region17: #{receiver_forward.1} parent=1 // pred_fallthru
      _
    // Predicated region
    $region18: #{receiver_forward.1} parent=1 // pred_check
      _
    $region19: #{receiver_forward.1} parent=1 // pred_check_branch
      %26 = sbr.rel (0) target = $region21
    $region20: #{receiver_forward.1} parent=1 // pred_region
      _
    $region21: #{receiver_forward.1} parent=1 // pred_fallthru
      _
    // Predicated region
    $region22: #{receiver_forward.1} parent=1 // pred_check
      _
    $region23: #{receiver_forward.1} parent=1 // pred_check_branch
      %28 = sbr.rel (0) target = $region25
    $region24: #{receiver_forward.1} parent=1 // pred_region
      _
    $region25: #{receiver_forward.1} parent=1 // pred_fallthru
      _
    // Predicated region
    $region26: #{receiver_forward.1} parent=1 // pred_check
      _
    $region27: #{receiver_forward.1} parent=1 // pred_check_branch
      %30 = sbr.rel (0) target = $region29
    $region28: #{receiver_forward.1} parent=1 // pred_region
      _
    $region29: #{receiver_forward.1} parent=1 // pred_fallthru
      _
    // Predicated region
    $region30: #{receiver_forward.1} parent=1 // pred_check
      _
    $region31: #{receiver_forward.1} parent=1 // pred_check_branch
      %32 = sbr.rel (0) target = $region33
    $region32: #{receiver_forward.1} parent=1 // pred_region
      _
    $region33: #{receiver_forward.1} parent=1 // pred_fallthru
      _
    %v34 = vld [vmem:[%s0] sm:$0xff]
    %v35 = vld [vmem:[%s0 + $0x8] sm:$0xff]
    %v36 = vld [vmem:[%s0 + $0x10] sm:$0xff]
    %v37 = vld [vmem:[%s0 + $0x18] sm:$0xff]
    %v38 = vld [vmem:[%s0 + $0x20] sm:$0xff]
    %v39 = vld [vmem:[%s0 + $0x28] sm:$0xff]
    %v40 = vld [vmem:[%s0 + $0x30] sm:$0xff]
    %v41 = vld [vmem:[%s0 + $0x38] sm:$0xff]
    %v42 = vld [vmem:[%s1] sm:$0xf]
    %v43 = vld [vmem:[%s1 + $0x4] sm:$0xf]
    %v44 = vld [vmem:[%s1 + $0x8] sm:$0xf]
    %v45 = vld [vmem:[%s1 + $0xc] sm:$0xf]
    %v46 = vld [vmem:[%s1 + $0x10] sm:$0xf]
    %v47 = vld [vmem:[%s1 + $0x14] sm:$0xf]
    %v48 = vld [vmem:[%s1 + $0x18] sm:$0xf]
    %v49 = vld [vmem:[%s1 + $0x1c] sm:$0xf]
    %v50 = vld [vmem:[%s1 + $0x20] sm:$0xf]
    %v51 = vld [vmem:[%s1 + $0x24] sm:$0xf]
    %v52 = vld [vmem:[%s1 + $0x28] sm:$0xf]
    %v53 = vld [vmem:[%s1 + $0x2c] sm:$0xf]
    %v54 = vld [vmem:[%s1 + $0x30] sm:$0xf]
    %v55 = vld [vmem:[%s1 + $0x34] sm:$0xf]
    %v56 = vld [vmem:[%s1 + $0x38] sm:$0xf]
    %v57 = vld [vmem:[%s1 + $0x3c] sm:$0xf]
    %v58 = vld [vmem:[%s1 + $0x40] sm:$0xf]
    %v59 = vld [vmem:[%s1 + $0x44] sm:$0xf]
    %v60 = vld [vmem:[%s1 + $0x48] sm:$0xf]
    %v61 = vld [vmem:[%s1 + $0x4c] sm:$0xf]
    %v62 = vld [vmem:[%s1 + $0x50] sm:$0xf]
    %v63 = vld [vmem:[%s1 + $0x54] sm:$0xf]
    %v64 = vld [vmem:[%s1 + $0x58] sm:$0xf]
    %v65 = vld [vmem:[%s1 + $0x5c] sm:$0xf]
    %v66 = vld [vmem:[%s1 + $0x60] sm:$0xf]
    %v67 = vld [vmem:[%s1 + $0x64] sm:$0xf]
    %v68 = vld [vmem:[%s1 + $0x68] sm:$0xf]
    %v69 = vld [vmem:[%s1 + $0x6c] sm:$0xf]
    %v70 = vld [vmem:[%s1 + $0x70] sm:$0xf]
    %v71 = vld [vmem:[%s1 + $0x74] sm:$0xf]
    %v72 = vld [vmem:[%s1 + $0x78] sm:$0xf]
    %v73 = vld [vmem:[%s1 + $0x7c] sm:$0xf]
    %v74 = vld [vmem:[%s1 + $0x80] sm:$0xf]
    %v75 = vld [vmem:[%s1 + $0x84] sm:$0xf]
    %v76 = vld [vmem:[%s1 + $0x88] sm:$0xf]
    %v77 = vld [vmem:[%s1 + $0x8c] sm:$0xf]
    %v78 = vld [vmem:[%s1 + $0x90] sm:$0xf]
    %v79 = vld [vmem:[%s1 + $0x94] sm:$0xf]
    %v80 = vld [vmem:[%s1 + $0x98] sm:$0xf]
    %v81 = vld [vmem:[%s1 + $0x9c] sm:$0xf]
    %v82 = vld [vmem:[%s1 + $0xa0] sm:$0xf]
    %v83 = vld [vmem:[%s1 + $0xa4] sm:$0xf]
    %v84 = vld [vmem:[%s1 + $0xa8] sm:$0xf]
    %v85 = vld [vmem:[%s1 + $0xac] sm:$0xf]
    %v86 = vld [vmem:[%s1 + $0xb0] sm:$0xf]
    %v87 = vld [vmem:[%s1 + $0xb4] sm:$0xf]
    %v88 = vld [vmem:[%s1 + $0xb8] sm:$0xf]
    %v89 = vld [vmem:[%s1 + $0xbc] sm:$0xf]
    %v90 = vld [vmem:[%s1 + $0xc0] sm:$0xf]
    %v91 = vld [vmem:[%s1 + $0xc4] sm:$0xf]
    %v92 = vld [vmem:[%s1 + $0xc8] sm:$0xf]
    %v93 = vld [vmem:[%s1 + $0xcc] sm:$0xf]
    %v94 = vld [vmem:[%s1 + $0xd0] sm:$0xf]
    %v95 = vld [vmem:[%s1 + $0xd4] sm:$0xf]
    %v96 = vld [vmem:[%s1 + $0xd8] sm:$0xf]
    %v97 = vld [vmem:[%s1 + $0xdc] sm:$0xf]
    %v98 = vld [vmem:[%s1 + $0xe0] sm:$0xf]
    %v99 = vld [vmem:[%s1 + $0xe4] sm:$0xf]
    %v100 = vld [vmem:[%s1 + $0xe8] sm:$0xf]
    %v101 = vld [vmem:[%s1 + $0xec] sm:$0xf]
    %v102 = vld [vmem:[%s1 + $0xf0] sm:$0xf]
    %v103 = vld [vmem:[%s1 + $0xf4] sm:$0xf]
    %v104 = vld [vmem:[%s1 + $0xf8] sm:$0xf]
    %v105 = vld [vmem:[%s1 + $0xfc] sm:$0xf]
    %v106 = vld [vmem:[%s1 + $0x100] sm:$0xf]
    %v107 = vld [vmem:[%s1 + $0x104] sm:$0xf]
    %v108 = vld [vmem:[%s1 + $0x108] sm:$0xf]
    %v109 = vld [vmem:[%s1 + $0x10c] sm:$0xf]
    %v110 = vld [vmem:[%s1 + $0x110] sm:$0xf]
    %v111 = vld [vmem:[%s1 + $0x114] sm:$0xf]
    %v112 = vld [vmem:[%s1 + $0x118] sm:$0xf]
    %v113 = vld [vmem:[%s1 + $0x11c] sm:$0xf]
    %v114 = vld [vmem:[%s1 + $0x120] sm:$0xf]
    %v115 = vld [vmem:[%s1 + $0x124] sm:$0xf]
    %v116 = vld [vmem:[%s1 + $0x128] sm:$0xf]
    %v117 = vld [vmem:[%s1 + $0x12c] sm:$0xf]
    %v118 = vld [vmem:[%s1 + $0x130] sm:$0xf]
    %v119 = vld [vmem:[%s1 + $0x134] sm:$0xf]
    %v120 = vld [vmem:[%s1 + $0x138] sm:$0xf]
    %v121 = vld [vmem:[%s1 + $0x13c] sm:$0xf]
    %v122 = vld [vmem:[%s1 + $0x140] sm:$0xf]
    %v123 = vld [vmem:[%s1 + $0x144] sm:$0xf]
    %v124 = vld [vmem:[%s1 + $0x148] sm:$0xf]
    %v125 = vld [vmem:[%s1 + $0x14c] sm:$0xf]
    %v126 = vld [vmem:[%s1 + $0x150] sm:$0xf]
    %v127 = vld [vmem:[%s1 + $0x154] sm:$0xf]
    %v128 = vld [vmem:[%s1 + $0x158] sm:$0xf]
    %v129 = vld [vmem:[%s1 + $0x15c] sm:$0xf]
    %v130 = vld [vmem:[%s1 + $0x160] sm:$0xf]
    %v131 = vld [vmem:[%s1 + $0x164] sm:$0xf]
    %v132 = vld [vmem:[%s1 + $0x168] sm:$0xf]
    %v133 = vld [vmem:[%s1 + $0x16c] sm:$0xf]
    %v134 = vld [vmem:[%s1 + $0x170] sm:$0xf]
    %v135 = vld [vmem:[%s1 + $0x174] sm:$0xf]
    %v136 = vld [vmem:[%s1 + $0x178] sm:$0xf]
    %v137 = vld [vmem:[%s1 + $0x17c] sm:$0xf]
    %v138 = vld [vmem:[%s1 + $0x180] sm:$0xf]
    %v139 = vld [vmem:[%s1 + $0x184] sm:$0xf]
    %v140 = vld [vmem:[%s1 + $0x188] sm:$0xf]
    %v141 = vld [vmem:[%s1 + $0x18c] sm:$0xf]
    %v142 = vld [vmem:[%s1 + $0x190] sm:$0xf]
    %v143 = vld [vmem:[%s1 + $0x194] sm:$0xf]
    %v144 = vld [vmem:[%s1 + $0x198] sm:$0xf]
    %v145 = vld [vmem:[%s1 + $0x19c] sm:$0xf]
    %v146 = vld [vmem:[%s1 + $0x1a0] sm:$0xf]
    %v147 = vld [vmem:[%s1 + $0x1a4] sm:$0xf]
    %v148 = vld [vmem:[%s1 + $0x1a8] sm:$0xf]
    %v149 = vld [vmem:[%s1 + $0x1ac] sm:$0xf]
    %v150 = vld [vmem:[%s1 + $0x1b0] sm:$0xf]
    %v151 = vld [vmem:[%s1 + $0x1b4] sm:$0xf]
    %v152 = vld [vmem:[%s1 + $0x1b8] sm:$0xf]
    %v153 = vld [vmem:[%s1 + $0x1bc] sm:$0xf]
    %v154 = vld [vmem:[%s1 + $0x1c0] sm:$0xf]
    %v155 = vld [vmem:[%s1 + $0x1c4] sm:$0xf]
    %v156 = vld [vmem:[%s1 + $0x1c8] sm:$0xf]
    %v157 = vld [vmem:[%s1 + $0x1cc] sm:$0xf]
    %v158 = vld [vmem:[%s1 + $0x1d0] sm:$0xf]
    %v159 = vld [vmem:[%s1 + $0x1d4] sm:$0xf]
    %v160 = vld [vmem:[%s1 + $0x1d8] sm:$0xf]
    %v161 = vld [vmem:[%s1 + $0x1dc] sm:$0xf]
    %v162 = vld [vmem:[%s1 + $0x1e0] sm:$0xf]
    %v163 = vld [vmem:[%s1 + $0x1e4] sm:$0xf]
    %v164 = vld [vmem:[%s1 + $0x1e8] sm:$0xf]
    %v165 = vld [vmem:[%s1 + $0x1ec] sm:$0xf]
    %v166 = vld [vmem:[%s1 + $0x1f0] sm:$0xf]
    %v167 = vld [vmem:[%s1 + $0x1f4] sm:$0xf]
    %v168 = vld [vmem:[%s1 + $0x1f8] sm:$0xf]
    %v169 = vld [vmem:[%s1 + $0x1fc] sm:$0xf]
    %v170 = vld [vmem:[%s2] sm:$0x1]
    %v172 = vlaneseq
    %v173 = vshrl.u32 %v172, 7
    %v174 = vsub.s32 0, %v173
    %v175 = vrot.slane %v170, %v174
    %v185 = vunpack.c.l.b16 %v34
    %v186 = vunpack.c.h.b16 %v34
    %v187 = vunpack.c.l.b16 %v35
    %v188 = vunpack.c.h.b16 %v35
    %v189 = vunpack.c.l.b16 %v36
    %v190 = vunpack.c.h.b16 %v36
    %v191 = vunpack.c.l.b16 %v37
    %v192 = vunpack.c.h.b16 %v37
    %v193 = vunpack.c.l.b16 %v38
    %v194 = vunpack.c.h.b16 %v38
    %v195 = vunpack.c.l.b16 %v39
    %v196 = vunpack.c.h.b16 %v39
    %v197 = vunpack.c.l.b16 %v40
    %v198 = vunpack.c.h.b16 %v40
    %v199 = vunpack.c.l.b16 %v41
    %v200 = vunpack.c.h.b16 %v41
    %v201 = vpack.c.b16 %v193, %v185
    %v202 = vpack.c.b16 %v194, %v186
    %v203 = vpack.c.b16 %v195, %v187
    %v204 = vpack.c.b16 %v196, %v188
    %v205 = vpack.c.b16 %v197, %v189
    %v206 = vpack.c.b16 %v198, %v190
    %v207 = vpack.c.b16 %v199, %v191
    %v208 = vpack.c.b16 %v200, %v192
    %v345 = vunpack.c.l.b16 %v42
    %v346 = vunpack.c.l.b16 %v43
    %v347 = vunpack.c.l.b16 %v44
    %v348 = vunpack.c.l.b16 %v45
    %v349 = vunpack.c.l.b16 %v46
    %v350 = vunpack.c.l.b16 %v47
    %v351 = vunpack.c.l.b16 %v48
    %v352 = vunpack.c.l.b16 %v49
    %v353 = vunpack.c.l.b16 %v50
    %v354 = vunpack.c.l.b16 %v51
    %v355 = vunpack.c.l.b16 %v52
    %v356 = vunpack.c.l.b16 %v53
    %v357 = vunpack.c.l.b16 %v54
    %v358 = vunpack.c.l.b16 %v55
    %v359 = vunpack.c.l.b16 %v56
    %v360 = vunpack.c.l.b16 %v57
    %v361 = vunpack.c.l.b16 %v58
    %v362 = vunpack.c.l.b16 %v59
    %v363 = vunpack.c.l.b16 %v60
    %v364 = vunpack.c.l.b16 %v61
    %v365 = vunpack.c.l.b16 %v62
    %v366 = vunpack.c.l.b16 %v63
    %v367 = vunpack.c.l.b16 %v64
    %v368 = vunpack.c.l.b16 %v65
    %v369 = vunpack.c.l.b16 %v66
    %v370 = vunpack.c.l.b16 %v67
    %v371 = vunpack.c.l.b16 %v68
    %v372 = vunpack.c.l.b16 %v69
    %v373 = vunpack.c.l.b16 %v70
    %v374 = vunpack.c.l.b16 %v71
    %v375 = vunpack.c.l.b16 %v72
    %v376 = vunpack.c.l.b16 %v73
    %v377 = vunpack.c.l.b16 %v74
    %v378 = vunpack.c.l.b16 %v75
    %v379 = vunpack.c.l.b16 %v76
    %v380 = vunpack.c.l.b16 %v77
    %v381 = vunpack.c.l.b16 %v78
    %v382 = vunpack.c.l.b16 %v79
    %v383 = vunpack.c.l.b16 %v80
    %v384 = vunpack.c.l.b16 %v81
    %v385 = vunpack.c.l.b16 %v82
    %v386 = vunpack.c.l.b16 %v83
    %v387 = vunpack.c.l.b16 %v84
    %v388 = vunpack.c.l.b16 %v85
    %v389 = vunpack.c.l.b16 %v86
    %v390 = vunpack.c.l.b16 %v87
    %v391 = vunpack.c.l.b16 %v88
    %v392 = vunpack.c.l.b16 %v89
    %v393 = vunpack.c.l.b16 %v90
    %v394 = vunpack.c.l.b16 %v91
    %v395 = vunpack.c.l.b16 %v92
    %v396 = vunpack.c.l.b16 %v93
    %v397 = vunpack.c.l.b16 %v94
    %v398 = vunpack.c.l.b16 %v95
    %v399 = vunpack.c.l.b16 %v96
    %v400 = vunpack.c.l.b16 %v97
    %v401 = vunpack.c.l.b16 %v98
    %v402 = vunpack.c.l.b16 %v99
    %v403 = vunpack.c.l.b16 %v100
    %v404 = vunpack.c.l.b16 %v101
    %v405 = vunpack.c.l.b16 %v102
    %v406 = vunpack.c.l.b16 %v103
    %v407 = vunpack.c.l.b16 %v104
    %v408 = vunpack.c.l.b16 %v105
    %v409 = vunpack.c.l.b16 %v106
    %v410 = vunpack.c.l.b16 %v107
    %v411 = vunpack.c.l.b16 %v108
    %v412 = vunpack.c.l.b16 %v109
    %v413 = vunpack.c.l.b16 %v110
    %v414 = vunpack.c.l.b16 %v111
    %v415 = vunpack.c.l.b16 %v112
    %v416 = vunpack.c.l.b16 %v113
    %v417 = vunpack.c.l.b16 %v114
    %v418 = vunpack.c.l.b16 %v115
    %v419 = vunpack.c.l.b16 %v116
    %v420 = vunpack.c.l.b16 %v117
    %v421 = vunpack.c.l.b16 %v118
    %v422 = vunpack.c.l.b16 %v119
    %v423 = vunpack.c.l.b16 %v120
    %v424 = vunpack.c.l.b16 %v121
    %v425 = vunpack.c.l.b16 %v122
    %v426 = vunpack.c.l.b16 %v123
    %v427 = vunpack.c.l.b16 %v124
    %v428 = vunpack.c.l.b16 %v125
    %v429 = vunpack.c.l.b16 %v126
    %v430 = vunpack.c.l.b16 %v127
    %v431 = vunpack.c.l.b16 %v128
    %v432 = vunpack.c.l.b16 %v129
    %v433 = vunpack.c.l.b16 %v130
    %v434 = vunpack.c.l.b16 %v131
    %v435 = vunpack.c.l.b16 %v132
    %v436 = vunpack.c.l.b16 %v133
    %v437 = vunpack.c.l.b16 %v134
    %v438 = vunpack.c.l.b16 %v135
    %v439 = vunpack.c.l.b16 %v136
    %v440 = vunpack.c.l.b16 %v137
    %v441 = vunpack.c.l.b16 %v138
    %v442 = vunpack.c.l.b16 %v139
    %v443 = vunpack.c.l.b16 %v140
    %v444 = vunpack.c.l.b16 %v141
    %v445 = vunpack.c.l.b16 %v142
    %v446 = vunpack.c.l.b16 %v143
    %v447 = vunpack.c.l.b16 %v144
    %v448 = vunpack.c.l.b16 %v145
    %v449 = vunpack.c.l.b16 %v146
    %v450 = vunpack.c.l.b16 %v147
    %v451 = vunpack.c.l.b16 %v148
    %v452 = vunpack.c.l.b16 %v149
    %v453 = vunpack.c.l.b16 %v150
    %v454 = vunpack.c.l.b16 %v151
    %v455 = vunpack.c.l.b16 %v152
    %v456 = vunpack.c.l.b16 %v153
    %v457 = vunpack.c.l.b16 %v154
    %v458 = vunpack.c.l.b16 %v155
    %v459 = vunpack.c.l.b16 %v156
    %v460 = vunpack.c.l.b16 %v157
    %v461 = vunpack.c.l.b16 %v158
    %v462 = vunpack.c.l.b16 %v159
    %v463 = vunpack.c.l.b16 %v160
    %v464 = vunpack.c.l.b16 %v161
    %v465 = vunpack.c.l.b16 %v162
    %v466 = vunpack.c.l.b16 %v163
    %v467 = vunpack.c.l.b16 %v164
    %v468 = vunpack.c.l.b16 %v165
    %v469 = vunpack.c.l.b16 %v166
    %v470 = vunpack.c.l.b16 %v167
    %v471 = vunpack.c.l.b16 %v168
    %v472 = vunpack.c.l.b16 %v169
    %v473 = vpack.c.b16 %v346, %v345
    %v474 = vpack.c.b16 %v348, %v347
    %v475 = vpack.c.b16 %v350, %v349
    %v476 = vpack.c.b16 %v352, %v351
    %v477 = vpack.c.b16 %v354, %v353
    %v478 = vpack.c.b16 %v356, %v355
    %v479 = vpack.c.b16 %v358, %v357
    %v480 = vpack.c.b16 %v360, %v359
    %v481 = vpack.c.b16 %v362, %v361
    %v482 = vpack.c.b16 %v364, %v363
    %v483 = vpack.c.b16 %v366, %v365
    %v484 = vpack.c.b16 %v368, %v367
    %v485 = vpack.c.b16 %v370, %v369
    %v486 = vpack.c.b16 %v372, %v371
    %v487 = vpack.c.b16 %v374, %v373
    %v488 = vpack.c.b16 %v376, %v375
    %v489 = vpack.c.b16 %v378, %v377
    %v490 = vpack.c.b16 %v380, %v379
    %v491 = vpack.c.b16 %v382, %v381
    %v492 = vpack.c.b16 %v384, %v383
    %v493 = vpack.c.b16 %v386, %v385
    %v494 = vpack.c.b16 %v388, %v387
    %v495 = vpack.c.b16 %v390, %v389
    %v496 = vpack.c.b16 %v392, %v391
    %v497 = vpack.c.b16 %v394, %v393
    %v498 = vpack.c.b16 %v396, %v395
    %v499 = vpack.c.b16 %v398, %v397
    %v500 = vpack.c.b16 %v400, %v399
    %v501 = vpack.c.b16 %v402, %v401
    %v502 = vpack.c.b16 %v404, %v403
    %v503 = vpack.c.b16 %v406, %v405
    %v504 = vpack.c.b16 %v408, %v407
    %v505 = vpack.c.b16 %v410, %v409
    %v506 = vpack.c.b16 %v412, %v411
    %v507 = vpack.c.b16 %v414, %v413
    %v508 = vpack.c.b16 %v416, %v415
    %v509 = vpack.c.b16 %v418, %v417
    %v510 = vpack.c.b16 %v420, %v419
    %v511 = vpack.c.b16 %v422, %v421
    %v512 = vpack.c.b16 %v424, %v423
    %v513 = vpack.c.b16 %v426, %v425
    %v514 = vpack.c.b16 %v428, %v427
    %v515 = vpack.c.b16 %v430, %v429
    %v516 = vpack.c.b16 %v432, %v431
    %v517 = vpack.c.b16 %v434, %v433
    %v518 = vpack.c.b16 %v436, %v435
    %v519 = vpack.c.b16 %v438, %v437
    %v520 = vpack.c.b16 %v440, %v439
    %v521 = vpack.c.b16 %v442, %v441
    %v522 = vpack.c.b16 %v444, %v443
    %v523 = vpack.c.b16 %v446, %v445
    %v524 = vpack.c.b16 %v448, %v447
    %v525 = vpack.c.b16 %v450, %v449
    %v526 = vpack.c.b16 %v452, %v451
    %v527 = vpack.c.b16 %v454, %v453
    %v528 = vpack.c.b16 %v456, %v455
    %v529 = vpack.c.b16 %v458, %v457
    %v530 = vpack.c.b16 %v460, %v459
    %v531 = vpack.c.b16 %v462, %v461
    %v532 = vpack.c.b16 %v464, %v463
    %v533 = vpack.c.b16 %v466, %v465
    %v534 = vpack.c.b16 %v468, %v467
    %v535 = vpack.c.b16 %v470, %v469
    %v536 = vpack.c.b16 %v472, %v471
    %601 = vmatprep.subr.bf16.mxu0 0
    %602 = vmatpush1.bf16.msra.mxu0 %v473
    %603 = vmatprep.subr.bf16.mxu0 0
    %604 = vmatpush1.bf16.msra.mxu0 %v474
    %605 = vmatprep.subr.bf16.mxu0 0
    %606 = vmatpush1.bf16.msra.mxu0 %v475
    %607 = vmatprep.subr.bf16.mxu0 0
    %608 = vmatpush1.bf16.msra.mxu0 %v476
    %609 = vmatprep.subr.bf16.mxu0 0
    %610 = vmatpush1.bf16.msra.mxu0 %v477
    %611 = vmatprep.subr.bf16.mxu0 0
    %612 = vmatpush1.bf16.msra.mxu0 %v478
    %613 = vmatprep.subr.bf16.mxu0 0
    %614 = vmatpush1.bf16.msra.mxu0 %v479
    %615 = vmatprep.subr.bf16.mxu0 0
    %616 = vmatpush1.bf16.msra.mxu0 %v480
    %617 = vmatprep.subr.bf16.mxu0 0
    %618 = vmatpush1.bf16.msra.mxu0 %v481
    %619 = vmatprep.subr.bf16.mxu0 0
    %620 = vmatpush1.bf16.msra.mxu0 %v482
    %621 = vmatprep.subr.bf16.mxu0 0
    %622 = vmatpush1.bf16.msra.mxu0 %v483
    %623 = vmatprep.subr.bf16.mxu0 0
    %624 = vmatpush1.bf16.msra.mxu0 %v484
    %625 = vmatprep.subr.bf16.mxu0 0
    %626 = vmatpush1.bf16.msra.mxu0 %v485
    %627 = vmatprep.subr.bf16.mxu0 0
    %628 = vmatpush1.bf16.msra.mxu0 %v486
    %629 = vmatprep.subr.bf16.mxu0 0
    %630 = vmatpush1.bf16.msra.mxu0 %v487
    %631 = vmatprep.subr.bf16.mxu0 0
    %632 = vmatpush1.bf16.msra.mxu0 %v488
    %633 = vmatprep.mubr.bf16.mxu0 %v202
    %634 = vmatmul.mubr.bf16.gmra.mrb[0].mxu0 %v201
    %v635 = vpop.f32.mrb[0].mxu0
    %v636 = vadd.f32 %v175, %v635
    %v637 = vpop.f32.mrb[0].mxu0
    %v638 = vpop.f32.mrb[0].mxu0
    %v639 = vadd.f32 %v175, %v638
    %v640 = vpop.f32.mrb[0].mxu0
    %641 = vdwg.mxu0
    %642 = vmatprep.subr.bf16.mxu0 0
    %643 = vmatpush1.bf16.msra.mxu0 %v489
    %644 = vmatprep.subr.bf16.mxu0 0
    %645 = vmatpush1.bf16.msra.mxu0 %v490
    %646 = vmatprep.subr.bf16.mxu0 0
    %647 = vmatpush1.bf16.msra.mxu0 %v491
    %648 = vmatprep.subr.bf16.mxu0 0
    %649 = vmatpush1.bf16.msra.mxu0 %v492
    %650 = vmatprep.subr.bf16.mxu0 0
    %651 = vmatpush1.bf16.msra.mxu0 %v493
    %652 = vmatprep.subr.bf16.mxu0 0
    %653 = vmatpush1.bf16.msra.mxu0 %v494
    %654 = vmatprep.subr.bf16.mxu0 0
    %655 = vmatpush1.bf16.msra.mxu0 %v495
    %656 = vmatprep.subr.bf16.mxu0 0
    %657 = vmatpush1.bf16.msra.mxu0 %v496
    %658 = vmatprep.subr.bf16.mxu0 0
    %659 = vmatpush1.bf16.msra.mxu0 %v497
    %660 = vmatprep.subr.bf16.mxu0 0
    %661 = vmatpush1.bf16.msra.mxu0 %v498
    %662 = vmatprep.subr.bf16.mxu0 0
    %663 = vmatpush1.bf16.msra.mxu0 %v499
    %664 = vmatprep.subr.bf16.mxu0 0
    %665 = vmatpush1.bf16.msra.mxu0 %v500
    %666 = vmatprep.subr.bf16.mxu0 0
    %667 = vmatpush1.bf16.msra.mxu0 %v501
    %668 = vmatprep.subr.bf16.mxu0 0
    %669 = vmatpush1.bf16.msra.mxu0 %v502
    %670 = vmatprep.subr.bf16.mxu0 0
    %671 = vmatpush1.bf16.msra.mxu0 %v503
    %672 = vmatprep.subr.bf16.mxu0 0
    %673 = vmatpush1.bf16.msra.mxu0 %v504
    %674 = vmatprep.mubr.bf16.mxu0 %v204
    %675 = vmatmul.mubr.bf16.gmra.mrb[0].mxu0 %v203
    %v676 = vpop.f32.mrb[0].mxu0
    %v677 = vadd.f32 %v636, %v676
    %v678 = vpop.f32.mrb[0].mxu0
    %v679 = vpop.f32.mrb[0].mxu0
    %v680 = vadd.f32 %v639, %v679
    %v681 = vpop.f32.mrb[0].mxu0
    %682 = vdwg.mxu0
    %683 = vmatprep.subr.bf16.mxu0 0
    %684 = vmatpush1.bf16.msra.mxu0 %v505
    %685 = vmatprep.subr.bf16.mxu0 0
    %686 = vmatpush1.bf16.msra.mxu0 %v506
    %687 = vmatprep.subr.bf16.mxu0 0
    %688 = vmatpush1.bf16.msra.mxu0 %v507
    %689 = vmatprep.subr.bf16.mxu0 0
    %690 = vmatpush1.bf16.msra.mxu0 %v508
    %691 = vmatprep.subr.bf16.mxu0 0
    %692 = vmatpush1.bf16.msra.mxu0 %v509
    %693 = vmatprep.subr.bf16.mxu0 0
    %694 = vmatpush1.bf16.msra.mxu0 %v510
    %695 = vmatprep.subr.bf16.mxu0 0
    %696 = vmatpush1.bf16.msra.mxu0 %v511
    %697 = vmatprep.subr.bf16.mxu0 0
    %698 = vmatpush1.bf16.msra.mxu0 %v512
    %699 = vmatprep.subr.bf16.mxu0 0
    %700 = vmatpush1.bf16.msra.mxu0 %v513
    %701 = vmatprep.subr.bf16.mxu0 0
    %702 = vmatpush1.bf16.msra.mxu0 %v514
    %703 = vmatprep.subr.bf16.mxu0 0
    %704 = vmatpush1.bf16.msra.mxu0 %v515
    %705 = vmatprep.subr.bf16.mxu0 0
    %706 = vmatpush1.bf16.msra.mxu0 %v516
    %707 = vmatprep.subr.bf16.mxu0 0
    %708 = vmatpush1.bf16.msra.mxu0 %v517
    %709 = vmatprep.subr.bf16.mxu0 0
    %710 = vmatpush1.bf16.msra.mxu0 %v518
    %711 = vmatprep.subr.bf16.mxu0 0
    %712 = vmatpush1.bf16.msra.mxu0 %v519
    %713 = vmatprep.subr.bf16.mxu0 0
    %714 = vmatpush1.bf16.msra.mxu0 %v520
    %715 = vmatprep.mubr.bf16.mxu0 %v206
    %716 = vmatmul.mubr.bf16.gmra.mrb[0].mxu0 %v205
    %v717 = vpop.f32.mrb[0].mxu0
    %v718 = vadd.f32 %v677, %v717
    %v719 = vpop.f32.mrb[0].mxu0
    %v720 = vpop.f32.mrb[0].mxu0
    %v721 = vadd.f32 %v680, %v720
    %v722 = vpop.f32.mrb[0].mxu0
    %723 = vdwg.mxu0
    %724 = vmatprep.subr.bf16.mxu0 0
    %725 = vmatpush1.bf16.msra.mxu0 %v521
    %726 = vmatprep.subr.bf16.mxu0 0
    %727 = vmatpush1.bf16.msra.mxu0 %v522
    %728 = vmatprep.subr.bf16.mxu0 0
    %729 = vmatpush1.bf16.msra.mxu0 %v523
    %730 = vmatprep.subr.bf16.mxu0 0
    %731 = vmatpush1.bf16.msra.mxu0 %v524
    %732 = vmatprep.subr.bf16.mxu0 0
    %733 = vmatpush1.bf16.msra.mxu0 %v525
    %734 = vmatprep.subr.bf16.mxu0 0
    %735 = vmatpush1.bf16.msra.mxu0 %v526
    %736 = vmatprep.subr.bf16.mxu0 0
    %737 = vmatpush1.bf16.msra.mxu0 %v527
    %738 = vmatprep.subr.bf16.mxu0 0
    %739 = vmatpush1.bf16.msra.mxu0 %v528
    %740 = vmatprep.subr.bf16.mxu0 0
    %741 = vmatpush1.bf16.msra.mxu0 %v529
    %742 = vmatprep.subr.bf16.mxu0 0
    %743 = vmatpush1.bf16.msra.mxu0 %v530
    %744 = vmatprep.subr.bf16.mxu0 0
    %745 = vmatpush1.bf16.msra.mxu0 %v531
    %746 = vmatprep.subr.bf16.mxu0 0
    %747 = vmatpush1.bf16.msra.mxu0 %v532
    %748 = vmatprep.subr.bf16.mxu0 0
    %749 = vmatpush1.bf16.msra.mxu0 %v533
    %750 = vmatprep.subr.bf16.mxu0 0
    %751 = vmatpush1.bf16.msra.mxu0 %v534
    %752 = vmatprep.subr.bf16.mxu0 0
    %753 = vmatpush1.bf16.msra.mxu0 %v535
    %754 = vmatprep.subr.bf16.mxu0 0
    %755 = vmatpush1.bf16.msra.mxu0 %v536
    %756 = vmatprep.mubr.bf16.mxu0 %v208
    %757 = vmatmul.mubr.bf16.gmra.mrb[0].mxu0 %v207
    %v758 = vpop.f32.mrb[0].mxu0
    %v759 = vadd.f32 %v718, %v758
    %v760 = vpop.f32.mrb[0].mxu0
    %v761 = vpop.f32.mrb[0].mxu0
    %v762 = vadd.f32 %v721, %v761
    %v763 = vpop.f32.mrb[0].mxu0
    %764 = vdwg.mxu0
    %765 = vst [vmem:[#allocation4] sm:$0xff] %v759
    %766 = vst [vmem:[#allocation4 + $0x8] sm:$0xff] %v762
    %v767 = vpack.c.bf16 %v762, %v759
    %v768 = vld [vmem:[%s3] sm:$0xf]
    %v769 = vld [vmem:[%s3 + $0x4] sm:$0xf]
    %v770 = vld [vmem:[%s3 + $0x8] sm:$0xf]
    %v771 = vld [vmem:[%s3 + $0xc] sm:$0xf]
    %v772 = vld [vmem:[%s3 + $0x10] sm:$0xf]
    %v773 = vld [vmem:[%s3 + $0x14] sm:$0xf]
    %v774 = vld [vmem:[%s3 + $0x18] sm:$0xf]
    %v775 = vld [vmem:[%s3 + $0x1c] sm:$0xf]
    %v776 = vld [vmem:[%s3 + $0x20] sm:$0xf]
    %v777 = vld [vmem:[%s3 + $0x24] sm:$0xf]
    %v778 = vld [vmem:[%s3 + $0x28] sm:$0xf]
    %v779 = vld [vmem:[%s3 + $0x2c] sm:$0xf]
    %v780 = vld [vmem:[%s3 + $0x30] sm:$0xf]
    %v781 = vld [vmem:[%s3 + $0x34] sm:$0xf]
    %v782 = vld [vmem:[%s3 + $0x38] sm:$0xf]
    %v783 = vld [vmem:[%s3 + $0x3c] sm:$0xf]
    %v784 = vld [vmem:[%s4] sm:$0x1]
    %v786 = vlaneseq
    %v787 = vshrl.u32 %v786, 7
    %v788 = vsub.s32 0, %v787
    %v789 = vrot.slane %v784, %v788
    %v807 = vunpack.c.l.b16 %v768
    %v808 = vunpack.c.l.b16 %v769
    %v809 = vunpack.c.l.b16 %v770
    %v810 = vunpack.c.l.b16 %v771
    %v811 = vunpack.c.l.b16 %v772
    %v812 = vunpack.c.l.b16 %v773
    %v813 = vunpack.c.l.b16 %v774
    %v814 = vunpack.c.l.b16 %v775
    %v815 = vunpack.c.l.b16 %v776
    %v816 = vunpack.c.l.b16 %v777
    %v817 = vunpack.c.l.b16 %v778
    %v818 = vunpack.c.l.b16 %v779
    %v819 = vunpack.c.l.b16 %v780
    %v820 = vunpack.c.l.b16 %v781
    %v821 = vunpack.c.l.b16 %v782
    %v822 = vunpack.c.l.b16 %v783
    %v823 = vpack.c.b16 %v808, %v807
    %v824 = vpack.c.b16 %v810, %v809
    %v825 = vpack.c.b16 %v812, %v811
    %v826 = vpack.c.b16 %v814, %v813
    %v827 = vpack.c.b16 %v816, %v815
    %v828 = vpack.c.b16 %v818, %v817
    %v829 = vpack.c.b16 %v820, %v819
    %v830 = vpack.c.b16 %v822, %v821
    %839 = vmatprep.subr.bf16.mxu0 0
    %840 = vmatpush1.bf16.msra.mxu0 %v823
    %841 = vmatprep.subr.bf16.mxu0 0
    %842 = vmatpush1.bf16.msra.mxu0 %v824
    %843 = vmatprep.subr.bf16.mxu0 0
    %844 = vmatpush1.bf16.msra.mxu0 %v825
    %845 = vmatprep.subr.bf16.mxu0 0
    %846 = vmatpush1.bf16.msra.mxu0 %v826
    %847 = vmatprep.subr.bf16.mxu0 0
    %848 = vmatpush1.bf16.msra.mxu0 %v827
    %849 = vmatprep.subr.bf16.mxu0 0
    %850 = vmatpush1.bf16.msra.mxu0 %v828
    %851 = vmatprep.subr.bf16.mxu0 0
    %852 = vmatpush1.bf16.msra.mxu0 %v829
    %853 = vmatprep.subr.bf16.mxu0 0
    %854 = vmatpush1.bf16.msra.mxu0 %v830
    %855 = vmatprep.subr.bf16.mxu0 0
    %856 = vmatpush1.bf16.msra.mxu0 0
    %857 = vmatprep.subr.bf16.mxu0 0
    %858 = vmatpush1.bf16.msra.mxu0 0
    %859 = vmatprep.subr.bf16.mxu0 0
    %860 = vmatpush1.bf16.msra.mxu0 0
    %861 = vmatprep.subr.bf16.mxu0 0
    %862 = vmatpush1.bf16.msra.mxu0 0
    %863 = vmatprep.subr.bf16.mxu0 0
    %864 = vmatpush1.bf16.msra.mxu0 0
    %865 = vmatprep.subr.bf16.mxu0 0
    %866 = vmatpush1.bf16.msra.mxu0 0
    %867 = vmatprep.subr.bf16.mxu0 0
    %868 = vmatpush1.bf16.msra.mxu0 0
    %869 = vmatprep.subr.bf16.mxu0 0
    %870 = vmatpush1.bf16.msra.mxu0 0
    %871 = vmatprep.mubr.bf16.mxu0 0
    %872 = vmatmul.mubr.bf16.gmra.mrb[0].mxu0 %v767
    %v873 = vpop.f32.mrb[0].mxu0
    %v874 = vadd.f32 %v789, %v873
    %v875 = vpop.f32.mrb[0].mxu0
    %v876 = vpop.f32.mrb[0].mxu0
    %v877 = vadd.f32 %v789, %v876
    %v878 = vpop.f32.mrb[0].mxu0
    %879 = vdwg.mxu0
    %v880 = vadd.f32 %v874, %v877
    %v881 = vrot.slane %v880, 4
    %v882 = vadd.f32 %v880, %v881
    %v883 = vrot.slane %v882, 2
    %v884 = vadd.f32 %v882, %v883
    %v885 = vrot.slane %v884, 1
    %v886 = vadd.f32 %v884, %v885
    %v887 = vrcp.pop 16.0
    %v888 = vmul.f32 %v886, %v887
    %v889 = vsub.f32 %v874, %v888
    %v890 = vsub.f32 %v877, %v888
    %v891 = vmul.f32 %v889, %v889
    %v892 = vmul.f32 %v890, %v890
    %v893 = vadd.f32 %v891, %v892
    %v894 = vrot.slane %v893, 4
    %v895 = vadd.f32 %v893, %v894
    %v896 = vrot.slane %v895, 2
    %v897 = vadd.f32 %v895, %v896
    %v898 = vrot.slane %v897, 1
    %v899 = vadd.f32 %v897, %v898
    %v900 = vmul.f32 %v899, %v887
    %v901 = vld [vmem:[%s5] sm:$0x1]
    %v902 = vadd.f32 %v900, 1e-05
    %v903 = vrsqrt.pop %v902
    %v904 = vmul.f32 %v901, %v903
    %v905 = vld [vmem:[%s6] sm:$0x1]
    %v906 = vmul.f32 %v888, %v904
    %v907 = vsub.f32 %v905, %v906
    %v909 = vlaneseq
    %v910 = vshrl.u32 %v909, 7
    %v911 = vsub.s32 0, %v910
    %v912 = vrot.slane %v904, %v911
    %v914 = vmul.f32 %v874, %v912
    %v915 = vmul.f32 %v877, %v912
    %v917 = vlaneseq
    %v918 = vshrl.u32 %v917, 7
    %v919 = vsub.s32 0, %v918
    %v920 = vrot.slane %v907, %v919
    %v922 = vadd.f32 %v914, %v920
    %v923 = vadd.f32 %v915, %v920
    %v924 = vmax.f32 %v922, 0.0
    %v925 = vmax.f32 %v923, 0.0
    %v926 = vpack.c.bf16 %v925, %v924
    %v927 = vld [vmem:[%s7] sm:$0xf]
    %v928 = vld [vmem:[%s7 + $0x4] sm:$0xf]
    %v929 = vld [vmem:[%s7 + $0x8] sm:$0xf]
    %v930 = vld [vmem:[%s7 + $0xc] sm:$0xf]
    %v931 = vld [vmem:[%s7 + $0x10] sm:$0xf]
    %v932 = vld [vmem:[%s7 + $0x14] sm:$0xf]
    %v933 = vld [vmem:[%s7 + $0x18] sm:$0xf]
    %v934 = vld [vmem:[%s7 + $0x1c] sm:$0xf]
    %v935 = vld [vmem:[%s7 + $0x20] sm:$0xf]
    %v936 = vld [vmem:[%s7 + $0x24] sm:$0xf]
    %v937 = vld [vmem:[%s7 + $0x28] sm:$0xf]
    %v938 = vld [vmem:[%s7 + $0x2c] sm:$0xf]
    %v939 = vld [vmem:[%s7 + $0x30] sm:$0xf]
    %v940 = vld [vmem:[%s7 + $0x34] sm:$0xf]
    %v941 = vld [vmem:[%s7 + $0x38] sm:$0xf]
    %v942 = vld [vmem:[%s7 + $0x3c] sm:$0xf]
    %v959 = vunpack.c.l.b16 %v927
    %v960 = vunpack.c.l.b16 %v928
    %v961 = vunpack.c.l.b16 %v929
    %v962 = vunpack.c.l.b16 %v930
    %v963 = vunpack.c.l.b16 %v931
    %v964 = vunpack.c.l.b16 %v932
    %v965 = vunpack.c.l.b16 %v933
    %v966 = vunpack.c.l.b16 %v934
    %v967 = vunpack.c.l.b16 %v935
    %v968 = vunpack.c.l.b16 %v936
    %v969 = vunpack.c.l.b16 %v937
    %v970 = vunpack.c.l.b16 %v938
    %v971 = vunpack.c.l.b16 %v939
    %v972 = vunpack.c.l.b16 %v940
    %v973 = vunpack.c.l.b16 %v941
    %v974 = vunpack.c.l.b16 %v942
    %v975 = vpack.c.b16 %v960, %v959
    %v976 = vpack.c.b16 %v962, %v961
    %v977 = vpack.c.b16 %v964, %v963
    %v978 = vpack.c.b16 %v966, %v965
    %v979 = vpack.c.b16 %v968, %v967
    %v980 = vpack.c.b16 %v970, %v969
    %v981 = vpack.c.b16 %v972, %v971
    %v982 = vpack.c.b16 %v974, %v973
    %991 = vmatprep.subr.bf16.mxu0 0
    %992 = vmatpush1.bf16.msra.mxu0 %v975
    %993 = vmatprep.subr.bf16.mxu0 0
    %994 = vmatpush1.bf16.msra.mxu0 %v976
    %995 = vmatprep.subr.bf16.mxu0 0
    %996 = vmatpush1.bf16.msra.mxu0 %v977
    %997 = vmatprep.subr.bf16.mxu0 0
    %998 = vmatpush1.bf16.msra.mxu0 %v978
    %999 = vmatprep.subr.bf16.mxu0 0
    %1000 = vmatpush1.bf16.msra.mxu0 %v979
    %1001 = vmatprep.subr.bf16.mxu0 0
    %1002 = vmatpush1.bf16.msra.mxu0 %v980
    %1003 = vmatprep.subr.bf16.mxu0 0
    %1004 = vmatpush1.bf16.msra.mxu0 %v981
    %1005 = vmatprep.subr.bf16.mxu0 0
    %1006 = vmatpush1.bf16.msra.mxu0 %v982
    %1007 = vmatprep.subr.bf16.mxu0 0
    %1008 = vmatpush1.bf16.msra.mxu0 0
    %1009 = vmatprep.subr.bf16.mxu0 0
    %1010 = vmatpush1.bf16.msra.mxu0 0
    %1011 = vmatprep.subr.bf16.mxu0 0
    %1012 = vmatpush1.bf16.msra.mxu0 0
    %1013 = vmatprep.subr.bf16.mxu0 0
    %1014 = vmatpush1.bf16.msra.mxu0 0
    %1015 = vmatprep.subr.bf16.mxu0 0
    %1016 = vmatpush1.bf16.msra.mxu0 0
    %1017 = vmatprep.subr.bf16.mxu0 0
    %1018 = vmatpush1.bf16.msra.mxu0 0
    %1019 = vmatprep.subr.bf16.mxu0 0
    %1020 = vmatpush1.bf16.msra.mxu0 0
    %1021 = vmatprep.subr.bf16.mxu0 0
    %1022 = vmatpush1.bf16.msra.mxu0 0
    %1023 = vmatprep.mubr.bf16.mxu0 0
    %1024 = vmatmul.mubr.bf16.gmra.mrb[0].mxu0 %v926
    %v1025 = vpop.f32.mrb[0].mxu0
    %v1026 = vadd.f32 0.0, %v1025
    %v1027 = vpop.f32.mrb[0].mxu0
    %v1028 = vpop.f32.mrb[0].mxu0
    %v1029 = vadd.f32 0.0, %v1028
    %v1030 = vpop.f32.mrb[0].mxu0
    %1031 = vdwg.mxu0
    %1032 = vst [vmem:[#allocation2] sm:$0xff] %v1026
    %1033 = vst [vmem:[#allocation2 + $0x8] sm:$0xff] %v1029
    // Predicated region
    $region34: #{receiver_forward.1} parent=1 // pred_check
      _
    $region35: #{receiver_forward.1} parent=1 // pred_check_branch
      %1035 = sbr.rel (0) target = $region37
    $region36: #{receiver_forward.1} parent=1 // pred_region
      %s1037 = ssub.s32 256, 256
      %1038 = vsyncadd [#allocation3], %s1037
      %s1039 = sshll.u32 [#allocation2], 4
      %s1040 = int_to_ptr.vmem [resolvable:$true] %s1039
      %1045 = dma.vmem_to_hbm [thread:$0]  %s1040, 256, %s8, [#allocation3], 128, 128, 8
    $region37: #{receiver_forward.1} parent=1 // pred_fallthru
      _
    // Predicated region
    $region38: #{receiver_forward.1} parent=1 // pred_check
      _
    $region39: #{receiver_forward.1} parent=1 // pred_check_branch
      %1047 = sbr.rel (0) target = $region41
    $region40: #{receiver_forward.1} parent=1 // pred_region
      %s1049 = ssub.s32 256, 256
      %1050 = vsyncadd [#allocation5], %s1049
      %s1051 = sshll.u32 [#allocation4], 4
      %s1052 = int_to_ptr.vmem [resolvable:$true] %s1051
      %1057 = dma.vmem_to_hbm [thread:$0]  %s1052, 256, %s9, [#allocation5], 128, 128, 8
    $region41: #{receiver_forward.1} parent=1 // pred_fallthru
      _
    // Predicated region
    $region42: #{receiver_forward.1} parent=1 // pred_check
      _
    $region43: #{receiver_forward.1} parent=1 // pred_check_branch
      %1059 = sbr.rel (0) target = $region45
    $region44: #{receiver_forward.1} parent=1 // pred_region
      %1060 = dma.done [#allocation3], 256
    $region45: #{receiver_forward.1} parent=1 // pred_fallthru
      _
    // Predicated region
    $region46: #{receiver_forward.1} parent=1 // pred_check
      _
    $region47: #{receiver_forward.1} parent=1 // pred_check_branch
      %1062 = sbr.rel (0) target = $region49
    $region48: #{receiver_forward.1} parent=1 // pred_region
      %1063 = dma.done [#allocation5], 256
    $region49: #{receiver_forward.1} parent=1 // pred_fallthru
      _
    %1064 = vsyncpa [#allocation3], 1
    %1065 = vsyncpa [#allocation5], 1

</llo_original>
